<compile_context>
chip_gen: v5e
topology: v5e:2x2
jax: 0.10.0
libtpu: 0.0.40
codegen_flags: <defaults>
</compile_context>

<pallas_src>
import jax
import jax.numpy as jnp
import numpy as np
from jax.experimental import pallas as pl
from jax.experimental.pallas import tpu as pltpu


_NEG_INF = float("-inf")
# Keep the double-buffered sequence blocks comfortably inside v7x's 64 MiB VMEM.
_X_VMEM_BUDGET_BYTES = 32 * 1024 * 1024
_VMEM_LIMIT_BYTES = 64 * 1024 * 1024


def _round_up(x, m):
    return (x + m - 1) // m * m


def _choose_d_tile(D):
    """Largest multiple-of-128 divisor of D, capped at 512, preferring >=2 tiles."""
    if D % 128 != 0:
        return D  # full-extent block along the lane dim is always legal
    cap = min(512, D // 2) if D >= 256 else D
    cap = max(128, cap // 128 * 128)
    for cand in range(cap, 127, -128):
        if D % cand == 0:
            return cand
    return 128


def _choose_s_tile(B, S, d_tile, itemsize):
    """Token tile: multiple of 8 sublanes, double-buffered block within budget."""
    cap = (_X_VMEM_BUDGET_BYTES // (2 * B * d_tile * itemsize)) // 8 * 8
    cap = max(8, cap)
    return int(min(cap, _round_up(S, 8)))


def masked_max_kernel(x_ref, bias_ref, o_ref, acc_ref):
    # x_ref:    (B, S_TILE, D_TILE)   sequence chunk
    # bias_ref: (B, S_TILE, 1)        additive 0 / -inf mask bias
    # o_ref:    (B, D_TILE)           pooled output tile
    # acc_ref:  (B, D_TILE) f32       running-max accumulator (VMEM scratch)
    s_idx = pl.program_id(1)

    @pl.when(s_idx == 0)
    def _():
        acc_ref[...] = jnp.full_like(acc_ref, _NEG_INF)

    # masked_fill(pad_mask, -inf) realized as a single VPU add (bias is 0/-inf).
    masked = x_ref[...].astype(jnp.float32) + bias_ref[...]
    acc_ref[...] = jnp.maximum(acc_ref[...], jnp.max(masked, axis=1))

    @pl.when(s_idx == pl.num_programs(1) - 1)
    def _():
        o_ref[...] = acc_ref[...].astype(o_ref.dtype)


def pooler_max_forward(sequence, mask, *, d_tile=None, s_tile=None):
    """Pallas equivalent of Pooler.forward with pool_type='max'."""
    B, S, D = sequence.shape
    if mask.ndim < 3:
        mask = mask[..., None]  # (B, S, 1), mirrors unsqueeze(-1)

    itemsize = jnp.dtype(sequence.dtype).itemsize
    if d_tile is None:
        d_tile = _choose_d_tile(D)
    if s_tile is None:
        s_tile = _choose_s_tile(B, S, d_tile, itemsize)
    assert D % d_tile == 0 and s_tile % 8 == 0

    # Additive 0 / -inf bias; padded tokens get -inf so they never win the max.
    bias = jnp.where(mask == 0, _NEG_INF, 0.0).astype(jnp.float32)
    s_pad = _round_up(S, s_tile)
    if s_pad != S:
        sequence = jnp.pad(sequence, ((0, 0), (0, s_pad - S), (0, 0)))
        bias = jnp.pad(bias, ((0, 0), (0, s_pad - S), (0, 0)),
                       constant_values=_NEG_INF)

    grid = (D // d_tile, s_pad // s_tile)
    bytes_accessed = (B * s_pad * D + B * s_pad + B * D) * itemsize
    cost = pl.CostEstimate(flops=2 * B * s_pad * D, transcendentals=0,
                           bytes_accessed=bytes_accessed)

    return pl.pallas_call(
        masked_max_kernel,
        out_shape=jax.ShapeDtypeStruct((B, D), sequence.dtype),
        grid_spec=pltpu.PrefetchScalarGridSpec(
            num_scalar_prefetch=0,
            grid=grid,
            in_specs=[
                pl.BlockSpec((B, s_tile, d_tile), lambda d, s: (0, s, d)),
                pl.BlockSpec((B, s_tile, 1), lambda d, s: (0, s, 0)),
            ],
            out_specs=pl.BlockSpec((B, d_tile), lambda d, s: (0, d)),
            scratch_shapes=[pltpu.VMEM((B, d_tile), jnp.float32)],
        ),
        compiler_params=pltpu.CompilerParams(
            dimension_semantics=("parallel", "arbitrary"),
            vmem_limit_bytes=_VMEM_LIMIT_BYTES,
        ),
        cost_estimate=cost,
    )(sequence, bias)


def init_pooler_params(num_facet, d_inp, key):
    """Deterministic init of the module's parameters (shapes from __init__).

    These parameters are unused on the default pool_type='max' forward path,
    but are materialized here to mirror the PyTorch module's state.
    """
    k1, k2 = jax.random.split(key, 2)
    bound = 1.0 / np.sqrt(d_inp)
    project_w = jax.random.uniform(k1, (d_inp, d_inp), jnp.float32, -bound, bound)
    project_b = jax.random.uniform(k2, (d_inp,), jnp.float32, -bound, bound)
    trans_w = jnp.tile(jnp.eye(d_inp, dtype=jnp.float32) / float(num_facet),
                       (1, num_facet))
    trans_b = jnp.zeros((d_inp,), jnp.float32)
    weight_global = jnp.ones((num_facet,), jnp.float32) / float(num_facet)
    return dict(project_w=project_w, project_b=project_b,
                trans_w=trans_w, trans_b=trans_b,
                weight_global=weight_global)


def _reference(sequence, mask):
    return jnp.max(jnp.where(mask[..., None] == 0, -jnp.inf, sequence), axis=1)


if __name__ == "__main__":
    key = jax.random.PRNGKey(0)
    k_seq, k_param = jax.random.split(key, 2)

    # --- test 1: small shapes, auto-chosen tiles (S not a multiple of 8) ----
    B, S, D = 2, 10, 256
    num_facet = 3
    sequence = jax.random.normal(k_seq, (B, S, D), dtype=jnp.float32)
    lengths = jnp.array([7, 4], dtype=jnp.int32)
    mask = (jnp.arange(S)[None, :] < lengths[:, None]).astype(jnp.float32)

    _ = init_pooler_params(num_facet, D, k_param)  # unused on the 'max' path

    out = jax.block_until_ready(pooler_max_forward(sequence, mask))
    assert out.shape == (B, D)
    np.testing.assert_allclose(np.asarray(out),
                               np.asarray(_reference(sequence, mask)),
                               rtol=0, atol=0)

    # --- test 2: force multiple S-reduction steps + ragged last chunk --------
    B2, S2, D2 = 2, 40, 256
    seq2 = jax.random.normal(jax.random.PRNGKey(1), (B2, S2, D2), dtype=jnp.float32)
    len2 = jnp.array([37, 19], dtype=jnp.int32)
    mask2 = (jnp.arange(S2)[None, :] < len2[:, None]).astype(jnp.float32)

    out2 = jax.block_until_ready(pooler_max_forward(seq2, mask2, s_tile=16))
    np.testing.assert_allclose(np.asarray(out2),
                               np.asarray(_reference(seq2, mask2)),
                               rtol=0, atol=0)

    # TODO(synk): facet-norm statistics / backward grad-hook instrumentation and
    # the non-'max' pool_type branches are host-side/training bookkeeping with no
    # clean Pallas equivalent; only the default 'max' inference path is kernelized.
    print("KERNEL_OK")
</pallas_src>

<mosaic_0001>
module attributes {stable_mosaic.version = 11 : i64} {
  func.func @masked_max_kernel(%arg0: i32, %arg1: i32, %arg2: memref<2x16x128xf32, #tpu.memory_space<vmem>>, %arg3: memref<2x16x1xf32, #tpu.memory_space<vmem>>, %arg4: memref<2x128xf32, #tpu.memory_space<vmem>>, %arg5: memref<2x128xf32, #tpu.memory_space<vmem>>) attributes {dimension_semantics = [#tpu.dimension_semantics<parallel>, #tpu.dimension_semantics<arbitrary>], iteration_bounds = array<i64: 2, 1>, scalar_prefetch = 0 : i64, scratch_operands = 1 : i64, tpu.core_type = #tpu.core_type<tc>, window_params = [{transform_indices = @transform_0, window_bounds = array<i64: 2, 16, 128>}, {transform_indices = @transform_1, window_bounds = array<i64: 2, 16, 1>}, {transform_indices = @transform_2, window_bounds = array<i64: 2, 128>}]} {
    %c0_i32 = arith.constant 0 : i32
    %0 = arith.cmpi eq, %arg1, %c0_i32 : i32
    %1 = arith.extui %0 : i1 to i32
    %c0_i32_0 = arith.constant 0 : i32
    %2 = arith.cmpi ne, %1, %c0_i32_0 : i32
    scf.if %2 {
      %cst_12 = arith.constant 0xFF800000 : f32
      %14 = vector.broadcast %cst_12 : f32 to vector<2x128xf32>
      %c0_13 = arith.constant 0 : index
      %c0_14 = arith.constant 0 : index
      %15 = vector.load %arg5[%c0_13, %c0_14] : memref<2x128xf32, #tpu.memory_space<vmem>>, vector<2x128xf32>
      tpu.vector_store %arg5[%c0_13, %c0_14], %14 {strides = array<i32>} : memref<2x128xf32, #tpu.memory_space<vmem>>, vector<2x128xf32>,
    } else {
    }
    %c0 = arith.constant 0 : index
    %c0_1 = arith.constant 0 : index
    %c0_2 = arith.constant 0 : index
    %3 = vector.load %arg2[%c0, %c0_1, %c0_2] : memref<2x16x128xf32, #tpu.memory_space<vmem>>, vector<2x16x128xf32>
    %c0_3 = arith.constant 0 : index
    %c0_4 = arith.constant 0 : index
    %c0_5 = arith.constant 0 : index
    %4 = vector.load %arg3[%c0_3, %c0_4, %c0_5] : memref<2x16x1xf32, #tpu.memory_space<vmem>>, vector<2x16x1xf32>
    %5 = vector.broadcast %4 : vector<2x16x1xf32> to vector<2x16x128xf32>
    %6 = arith.addf %3, %5 : vector<2x16x128xf32>
    %c0_6 = arith.constant 0 : index
    %c0_7 = arith.constant 0 : index
    %7 = vector.load %arg5[%c0_6, %c0_7] : memref<2x128xf32, #tpu.memory_space<vmem>>, vector<2x128xf32>
    %cst = arith.constant dense<0xFF800000> : vector<2x128xf32>
    %8 = vector.multi_reduction <maximumf>, %6, %cst [1] : vector<2x16x128xf32> to vector<2x128xf32>
    %9 = arith.maximumf %7, %8 : vector<2x128xf32>
    %c0_8 = arith.constant 0 : index
    %c0_9 = arith.constant 0 : index
    %10 = vector.load %arg5[%c0_8, %c0_9] : memref<2x128xf32, #tpu.memory_space<vmem>>, vector<2x128xf32>
    tpu.vector_store %arg5[%c0_8, %c0_9], %9 {strides = array<i32>} : memref<2x128xf32, #tpu.memory_space<vmem>>, vector<2x128xf32>,
    %c0_i32_10 = arith.constant 0 : i32
    %11 = arith.cmpi eq, %arg1, %c0_i32_10 : i32
    %12 = arith.extui %11 : i1 to i32
    %c0_i32_11 = arith.constant 0 : i32
    %13 = arith.cmpi ne, %12, %c0_i32_11 : i32
    scf.if %13 {
      %c0_12 = arith.constant 0 : index
      %c0_13 = arith.constant 0 : index
      %14 = vector.load %arg5[%c0_12, %c0_13] : memref<2x128xf32, #tpu.memory_space<vmem>>, vector<2x128xf32>
      %c0_14 = arith.constant 0 : index
      %c0_15 = arith.constant 0 : index
      %15 = vector.load %arg4[%c0_14, %c0_15] : memref<2x128xf32, #tpu.memory_space<vmem>>, vector<2x128xf32>
      tpu.vector_store %arg4[%c0_14, %c0_15], %14 {strides = array<i32>} : memref<2x128xf32, #tpu.memory_space<vmem>>, vector<2x128xf32>,
    } else {
    }
    return
  }
  func.func @transform_0(%arg0: i32, %arg1: i32) -> (i32, i32, i32) {
    %c0_i32 = arith.constant 0 : i32
    %c0_i32_0 = arith.constant 0 : i32
    return %c0_i32, %arg1, %arg0 : i32, i32, i32
  }
  func.func @transform_1(%arg0: i32, %arg1: i32) -> (i32, i32, i32) {
    %c0_i32 = arith.constant 0 : i32
    %c0_i32_0 = arith.constant 0 : i32
    %c0_i32_1 = arith.constant 0 : i32
    return %c0_i32, %arg1, %c0_i32_0 : i32, i32, i32
  }
  func.func @transform_2(%arg0: i32, %arg1: i32) -> (i32, i32) {
    %c0_i32 = arith.constant 0 : i32
    %c0_i32_0 = arith.constant 0 : i32
    return %c0_i32, %arg0 : i32, i32
  }
}

</mosaic_0001>

<llo_original>
// kernel: tpu_custom_call.1
$region0: #{tpu_custom_call.1}
  #allocation0 [shape = 'u32[]', space=smem, size = 0x4, offset = 0x4, fixed_abs, tag = 'smem constant byte address 0x4 - core index']
  #allocation1 [shape = 'u32[72,128]{1,0:T(1,128)}', space=vmem, size = 0x9000, scoped, tag = 'internal scratch']
  #allocation2 [shape = 'f32[2,128]{1,0:T(2,128)}', space=vmem, size = 0x400, scoped, tag = 'scratch operand']
  %s0 = inlined_call_operand.hbm [shape: f32[2,16,256], index: 0, kind: input, shape index: {}]
  %s1 = inlined_call_operand.vmem [shape: f32[2,16,1], index: 1, kind: input, shape index: {}]
  %s2 = inlined_call_operand.hbm [shape: f32[2,256], index: 2, kind: output, shape index: {}]
  %s3 = sld [smem:[#allocation0]]
  $region53: #{tpu_custom_call.1} parent=0
    _
  %s5 = ssub.s32 1, %s3
  %s6 = scalar_select 0, %s5, %s3
  $region1: #{tpu_custom_call.1} parent=0
    #allocation3 [shape = 'u8[32768]{0}', space=vmem, size = 0x8000, scoped, tag = 'input window, operand 0']
    #allocation4 [shape = 's32[2]{0}', space=sflag, size = 0x8, scoped, tag = 'scoped memory for tpu_custom_call.1']
    #allocation5 [shape = 's32[2]{0}', space=sflag, size = 0x8, scoped, tag = 'scoped memory for tpu_custom_call.1']
    #allocation6 [shape = 'u8[2048]{0}', space=vmem, size = 0x800, scoped, tag = 'output window, operand 0']
    %7 = vsyncpa [#allocation4], 0
    %s8 = scalar_lea.sflag [#allocation4], 1
    %9 = vsyncpa %s8, 0
    %10 = vsyncpa [#allocation5], 0
    %s11 = scalar_lea.sflag [#allocation5], 1
    %12 = vsyncpa %s11, 0
    loop: start=0, step=1, limit=4
    $region2: #{tpu_custom_call.1} parent=1 // loop_pre_header
      _
    $region3: #{tpu_custom_call.1} parent=1 // loop_header
      %s14 = sphi 0, %s18
      %p15 = scmp.ge.s32.totalorder %s14, 4
      %s21 = sphi 0, %s33
      %s22 = sphi 0, %s29
      %s23 = sphi 0, %s21
      %s24 = sphi 0, %s22
      %s25 = sphi 0, %s23
      %s26 = sphi 0, %s24
      %s38 = sphi 0, %s40
      %s41 = sphi 0, %s38
      %s42 = sphi 0, %s41
      %s58 = sphi 0, %s42
      %s64 = sphi 0, %s66
      %s67 = sphi 0, %s64
      %s68 = sphi 0, %s67
      %s84 = sphi 0, %s68
      %s90 = sphi 0, %s92
      %s93 = sphi 0, %s90
      %s94 = sphi 0, %s93
      %s110 = sphi 0, %s94
    $region4: #{tpu_custom_call.1} parent=1 // loop_header_branch
      %17 = sbr.rel (%p15) target = $region8
    $region5: #{tpu_custom_call.1} parent=1 // loop_body
      %s19 = ssub.s32 %s14, 1
      %s20 = ssub.s32 %s14, 2
      %s27 = sadd.s32 1, %s22
      %p28 = scmp.ge.s32.totalorder %s27, 1
      %s29 = scalar_select %p28, 0, %s27
      %s30 = sadd.s32 1, %s21
      %s31 = scalar_select %p28, %s30, %s21
      %p32 = scmp.ge.s32.totalorder %s31, 2
      %s33 = scalar_select %p32, 0, %s31
      %s34 = ssub.s32 %s22, %s29
      %s35 = ssub.s32 %s21, %s33
      %s36 = sor.u32 %s34, %s35
      %p37 = scmp.eq.s32.totalorder %s36, 0
      %s39 = sadd.s32 %s38, 1
      %s40 = scalar_select %p37, %s38, %s39
      %p43 = pneg %p37
      %p44 = scmp.eq.s32.totalorder %s14, 1
      %p45 = por %p43, %p44
      %p46 = scmp.ne.s32.totalorder %s38, %s41
      %p47 = scmp.eq.s32.totalorder %s14, 0
      %p48 = por %p46, %p47
      %p49 = scmp.ne.s32.totalorder %s38, %s41
      %p50 = scmp.eq.s32.totalorder %s19, 1
      %p51 = por %p49, %p50
      %p52 = scmp.ne.s32.totalorder %s41, %s42
      %p53 = scmp.eq.s32.totalorder %s19, 0
      %p54 = por %p52, %p53
      %p55 = scmp.ne.s32.totalorder %s41, %s42
      %p56 = scmp.eq.s32.totalorder %s20, 1
      %p57 = por %p55, %p56
      %p59 = scmp.ne.s32.totalorder %s42, %s58
      %p60 = scmp.eq.s32.totalorder %s20, 0
      %p61 = por %p59, %p60
      %s62 = ssub.s32 %s22, %s29
      %p63 = scmp.eq.s32.totalorder %s62, 0
      %s65 = sadd.s32 %s64, 1
      %s66 = scalar_select %p63, %s64, %s65
      %p69 = pneg %p63
      %p70 = scmp.eq.s32.totalorder %s14, 1
      %p71 = por %p69, %p70
      %p72 = scmp.ne.s32.totalorder %s64, %s67
      %p73 = scmp.eq.s32.totalorder %s14, 0
      %p74 = por %p72, %p73
      %p75 = scmp.ne.s32.totalorder %s64, %s67
      %p76 = scmp.eq.s32.totalorder %s19, 1
      %p77 = por %p75, %p76
      %p78 = scmp.ne.s32.totalorder %s67, %s68
      %p79 = scmp.eq.s32.totalorder %s19, 0
      %p80 = por %p78, %p79
      %p81 = scmp.ne.s32.totalorder %s67, %s68
      %p82 = scmp.eq.s32.totalorder %s20, 1
      %p83 = por %p81, %p82
      %p85 = scmp.ne.s32.totalorder %s68, %s84
      %p86 = scmp.eq.s32.totalorder %s20, 0
      %p87 = por %p85, %p86
      %s88 = ssub.s32 %s21, %s33
      %p89 = scmp.eq.s32.totalorder %s88, 0
      %s91 = sadd.s32 %s90, 1
      %s92 = scalar_select %p89, %s90, %s91
      %p95 = pneg %p89
      %p96 = scmp.eq.s32.totalorder %s14, 1
      %p97 = por %p95, %p96
      %p98 = scmp.ne.s32.totalorder %s90, %s93
      %p99 = scmp.eq.s32.totalorder %s14, 0
      %p100 = por %p98, %p99
      %p101 = scmp.ne.s32.totalorder %s90, %s93
      %p102 = scmp.eq.s32.totalorder %s19, 1
      %p103 = por %p101, %p102
      %p104 = scmp.ne.s32.totalorder %s93, %s94
      %p105 = scmp.eq.s32.totalorder %s19, 0
      %p106 = por %p104, %p105
      %p107 = scmp.ne.s32.totalorder %s93, %s94
      %p108 = scmp.eq.s32.totalorder %s20, 1
      %p109 = por %p107, %p108
      %p111 = scmp.ne.s32.totalorder %s94, %s110
      %p112 = scmp.eq.s32.totalorder %s20, 0
      %p113 = por %p111, %p112
      %p114 = scmp.le.s32.totalorder 1, %s14
      %p115 = scmp.lt.s32.totalorder %s14, 3
      %p116 = pnand %p114, %p115
      %p117 = pneg %p116
      // Predicated region
      $region9: #{tpu_custom_call.1} parent=5 // pred_check
        _
      $region10: #{tpu_custom_call.1} parent=5 // pred_check_branch
        %119 = sbr.rel (%p116) target = $region12
      $region11: #{tpu_custom_call.1} parent=5 // pred_region
        %s120 = ssub.s32 %s14, 1
        // Predicated region
        $region13: #{tpu_custom_call.1} parent=11 // pred_check
          %p121 = pneg %p80
        $region14: #{tpu_custom_call.1} parent=11 // pred_check_branch
          %123 = sbr.rel (%p121) target = $region16
        $region15: #{tpu_custom_call.1} parent=11 // pred_region
          %s124 = smul.u32 2, %s24
          %p125 = scmp.lt.s32.totalorder %s124, 1
          %s126 = scalar_select %p125, %s124, 1
          %s127 = smul.addr %s126, 8
          %s128 = scalar_lea.vmem %s1, %s127
          %s129 = smul.u32 2, %s24
        $region16: #{tpu_custom_call.1} parent=11 // pred_fallthru
          _
      $region12: #{tpu_custom_call.1} parent=5 // pred_fallthru
        _
      %p130 = scmp.lt.s32.totalorder %s14, 2
      // Predicated region
      $region17: #{tpu_custom_call.1} parent=5 // pred_check
        %p131 = pneg %p130
      $region18: #{tpu_custom_call.1} parent=5 // pred_check_branch
        %133 = sbr.rel (%p131) target = $region20
      $region19: #{tpu_custom_call.1} parent=5 // pred_region
        // Predicated region
        $region21: #{tpu_custom_call.1} parent=19 // pred_check
          %p134 = pneg %p48
        $region22: #{tpu_custom_call.1} parent=19 // pred_check_branch
          %136 = sbr.rel (%p134) target = $region24
        $region23: #{tpu_custom_call.1} parent=19 // pred_region
          %s137 = sand.u32 %s38, 1
          %s138 = scalar_lea.sflag [#allocation4], %s137
          %s139 = sand.u32 %s38, 1
          %s140 = smul.addr %s139, 32
          %s141 = scalar_lea.vmem [#allocation3], %s140
          %s142 = smul.u32 2, %s22
          %144 = vsyncadd %s138, 0
          %s145 = smul.addr %s142, 2
          %s146 = sadd.s32 %s21, %s145
          %s147 = smul.addr %s146, 8
          %s148 = scalar_lea.hbm %s0, %s147
          %s149 = sshll.u32 %s148, 4
          %s150 = int_to_ptr.hbm [resolvable:$true] %s149
          %s151 = sshll.u32 %s141, 4
          %s152 = int_to_ptr.vmem [resolvable:$true] %s151
          %157 = dma.hbm_to_vmem [thread:$0]  %s150, 512, %s152, %s138, 256, 128, 8
        $region24: #{tpu_custom_call.1} parent=19 // pred_fallthru
          _
      $region20: #{tpu_custom_call.1} parent=5 // pred_fallthru
        _
      %p158 = scmp.le.s32.totalorder 1, %s14
      %p159 = scmp.lt.s32.totalorder %s14, 3
      %p160 = pnand %p158, %p159
      %p161 = pneg %p160
      // Predicated region
      $region25: #{tpu_custom_call.1} parent=5 // pred_check
        _
      $region26: #{tpu_custom_call.1} parent=5 // pred_check_branch
        %163 = sbr.rel (%p160) target = $region28
      $region27: #{tpu_custom_call.1} parent=5 // pred_region
        %s164 = ssub.s32 %s14, 1
        %s165 = sand.u32 %s41, 1
        %s166 = scalar_lea.sflag [#allocation4], %s165
        %s167 = sand.u32 %s41, 1
        %s168 = smul.addr %s167, 32
        %s169 = scalar_lea.vmem [#allocation3], %s168
        // Predicated region
        $region29: #{tpu_custom_call.1} parent=27 // pred_check
          %p170 = pneg %p54
        $region30: #{tpu_custom_call.1} parent=27 // pred_check_branch
          %172 = sbr.rel (%p170) target = $region32
        $region31: #{tpu_custom_call.1} parent=27 // pred_region
          %174 = dma.done %s166, 512
        $region32: #{tpu_custom_call.1} parent=27 // pred_fallthru
          _
        %s175 = sand.u32 %s41, 1
        %s176 = scalar_lea.sflag [#allocation4], %s175
        %s177 = sand.u32 %s41, 1
        %s178 = smul.addr %s177, 32
        %s179 = scalar_lea.vmem [#allocation3], %s178
        %p180 = pneg %p54
        %p181 = pneg %p51
        %s182 = smul.u32 2, %s24
        %p183 = scmp.lt.s32.totalorder %s182, 1
        %s184 = scalar_select %p183, %s182, 1
        %s185 = smul.addr %s184, 8
        %s186 = scalar_lea.vmem %s1, %s185
        %p187 = pneg %p80
        %p188 = pneg %p77
        %p189 = pneg %p106
        %p190 = pneg %p103
        %s191 = sand.u32 %s93, 1
        %s192 = scalar_lea.sflag [#allocation5], %s191
        %s193 = sand.u32 %s93, 1
        %s194 = smul.addr %s193, 2
        %s195 = scalar_lea.vmem [#allocation6], %s194
        %s196 = smul.u32 2, %s24
        %s197 = smul.u32 2, %s24
        %p198 = scmp.lt.s32.totalorder %s197, 1
        %s199 = scalar_select %p198, %s197, 1
        %s200 = smul.addr %s199, 8
        %s201 = scalar_lea.vmem %s1, %s200
        %s202 = smul.u32 2, %s24
        %p203 = scmp.eq.s32.totalorder %s24, 0
        // Predicated region
        $region33: #{tpu_custom_call.1} parent=27 // pred_check
          %p204 = pneg %p203
        $region34: #{tpu_custom_call.1} parent=27 // pred_check_branch
          %206 = sbr.rel (%p204) target = $region36
        $region35: #{tpu_custom_call.1} parent=27 // pred_region
          %207 = vst [vmem:[#allocation2] sm:$0x3] -inf
        $region36: #{tpu_custom_call.1} parent=27 // pred_fallthru
          _
        %v208 = vld [vmem:[%s169] sm:$0xff]
        %v209 = vld [vmem:[%s169 + $0x8] sm:$0xff]
        %v210 = vld [vmem:[%s169 + $0x10] sm:$0xff]
        %v211 = vld [vmem:[%s169 + $0x18] sm:$0xff]
        %v212 = vld [vmem:[%s201] sm:$0xff]
        %v213 = vld [vmem:[%s201 + $0x8] sm:$0xff]
        %v214 = vld [vmem:[%s201 + $0x10] sm:$0xff]
        %v215 = vld [vmem:[%s201 + $0x18] sm:$0xff]
        %217 = vset.pattern.permute.xlu0 0
        %218 = vperm.xlu0 %217, %v212
        %v219 = vpop.permute.xlu0 %218
        %222 = vset.pattern.permute.xlu0 0
        %223 = vperm.xlu0 %222, %v213
        %v224 = vpop.permute.xlu0 %223
        %227 = vset.pattern.permute.xlu0 0
        %228 = vperm.xlu0 %227, %v214
        %v229 = vpop.permute.xlu0 %228
        %232 = vset.pattern.permute.xlu0 0
        %233 = vperm.xlu0 %232, %v215
        %v234 = vpop.permute.xlu0 %233
        %v236 = vadd.f32 %v208, %v219
        %v237 = vadd.f32 %v209, %v224
        %v238 = vadd.f32 %v210, %v229
        %v239 = vadd.f32 %v211, %v234
        %v240 = vld [vmem:[#allocation2] sm:$0x3]
        %v241 = vmax.f32 %v236, %v237
        %v242 = vrot.slane %v241, 4
        %v243 = vmax.f32 %v241, %v242
        %v244 = vrot.slane %v243, 2
        %v245 = vmax.f32 %v243, %v244
        %v246 = vrot.slane %v245, 1
        %v247 = vmax.f32 %v245, %v246
        %v248 = vmax.f32 %v238, %v239
        %v249 = vrot.slane %v248, 4
        %v250 = vmax.f32 %v248, %v249
        %v251 = vrot.slane %v250, 2
        %v252 = vmax.f32 %v250, %v251
        %v253 = vrot.slane %v252, 1
        %v254 = vmax.f32 %v252, %v253
        %vm257 = vcmask 1041409
        %v258 = vsel %vm257, %v254, %v247
        %v260 = vmax.f32 %v240, %v258
        %261 = vst [vmem:[#allocation2] sm:$0x3] %v260
        // Predicated region
        $region37: #{tpu_custom_call.1} parent=27 // pred_check
          %p262 = pneg %p203
        $region38: #{tpu_custom_call.1} parent=27 // pred_check_branch
          %264 = sbr.rel (%p262) target = $region40
        $region39: #{tpu_custom_call.1} parent=27 // pred_region
          %v265 = vld [vmem:[#allocation2] sm:$0x3]
          %266 = vst [vmem:[%s195] sm:$0x3] %v265
        $region40: #{tpu_custom_call.1} parent=27 // pred_fallthru
          _
        %s267 = sand.u32 %s93, 1
        %s268 = scalar_lea.sflag [#allocation5], %s267
        %s269 = sand.u32 %s93, 1
        %s270 = smul.addr %s269, 2
        %s271 = scalar_lea.vmem [#allocation6], %s270
        // Predicated region
        $region41: #{tpu_custom_call.1} parent=27 // pred_check
          %p272 = pneg %p103
        $region42: #{tpu_custom_call.1} parent=27 // pred_check_branch
          %274 = sbr.rel (%p272) target = $region44
        $region43: #{tpu_custom_call.1} parent=27 // pred_region
          %276 = vsyncadd %s268, 0
          %s277 = smul.addr %s23, 2
          %s278 = scalar_lea.hbm %s2, %s277
          %s280 = sshll.u32 %s271, 4
          %s281 = int_to_ptr.vmem [resolvable:$true] %s280
          %s282 = sshll.u32 %s278, 4
          %s283 = int_to_ptr.hbm [resolvable:$true] %s282
          %285 = dma.vmem_to_hbm [thread:$0]  %s281, 32, %s283, %s268
        $region44: #{tpu_custom_call.1} parent=27 // pred_fallthru
          _
      $region28: #{tpu_custom_call.1} parent=5 // pred_fallthru
        _
      %p286 = scmp.le.s32.totalorder 2, %s14
      // Predicated region
      $region45: #{tpu_custom_call.1} parent=5 // pred_check
        %p287 = pneg %p286
      $region46: #{tpu_custom_call.1} parent=5 // pred_check_branch
        %289 = sbr.rel (%p287) target = $region48
      $region47: #{tpu_custom_call.1} parent=5 // pred_region
        %s290 = ssub.s32 %s14, 2
        // Predicated region
        $region49: #{tpu_custom_call.1} parent=47 // pred_check
          %p291 = pneg %p109
        $region50: #{tpu_custom_call.1} parent=47 // pred_check_branch
          %293 = sbr.rel (%p291) target = $region52
        $region51: #{tpu_custom_call.1} parent=47 // pred_region
          %s294 = sand.u32 %s94, 1
          %s295 = scalar_lea.sflag [#allocation5], %s294
          %s296 = sand.u32 %s94, 1
          %s297 = smul.addr %s296, 2
          %s298 = scalar_lea.vmem [#allocation6], %s297
          %300 = dma.done %s295, 32
        $region52: #{tpu_custom_call.1} parent=47 // pred_fallthru
          _
      $region48: #{tpu_custom_call.1} parent=5 // pred_fallthru
        _
    $region6: #{tpu_custom_call.1} parent=1 // loop_footer
      %s18 = sadd.s32 1, %s14
    $region7: #{tpu_custom_call.1} parent=1 // loop_footer_branch
      %13 = sbr.rel target = $region3
    $region8: #{tpu_custom_call.1} parent=1 // loop_exit
      _
    %301 = vsyncpa [#allocation4], 1
    %s302 = scalar_lea.sflag [#allocation4], 1
    %303 = vsyncpa %s302, 1
    %304 = vsyncpa [#allocation5], 1
    %s305 = scalar_lea.sflag [#allocation5], 1
    %306 = vsyncpa %s305, 1

</llo_original>
